<compile_context>
chip_gen: v7x
topology: tpu7x:2x2x1
jax: 0.10.0
libtpu: 0.0.40
codegen_flags: <defaults>
</compile_context>

<pallas_src>
import functools
import math

import jax
import jax.numpy as jnp
from jax.experimental import pallas as pl
from jax.experimental.pallas import tpu as pltpu

EPS = 1e-5


def _group_sum_lanes(t, P, A):
    """Exact circular group-sum along the last (lane) axis of size P*A.

    out[..., i] = sum_{k=0}^{P-1} t[..., (i +/- k*A) mod (P*A)]
    i.e. the sum over the P 'points' sharing axis a = i % A, broadcast back to
    every point position.  Uses a binary shift-and-add tree of pltpu.roll ops
    (XLU) -- works for any P, log2(P) doublings when P is a power of two.
    """
    acc = None
    covered = 0          # number of k-offsets already accumulated into acc
    win = t              # current window: sum over `size` consecutive k-offsets
    size = 1
    p = P
    while True:
        if p & 1:
            contrib = pltpu.roll(win, covered * A, axis=1) if covered else win
            acc = contrib if acc is None else acc + contrib
            covered += size
        p >>= 1
        if not p:
            break
        win = win + pltpu.roll(win, size * A, axis=1)
        size *= 2
    return acc


def _axis_ln_kernel(P, A, x_ref, g_ref, b_ref, o_ref):
    # x_ref/o_ref: (R, P*A) lane-dense blocks; g_ref/b_ref: (1, P*A), resident.
    x = x_ref[...].astype(jnp.float32)                 # (R, P*A)
    w = (x != 0).astype(jnp.float32)                   # nonzero mask

    cnt = _group_sum_lanes(w, P, A)                    # per-axis counts, broadcast over points
    inv_denom = pl.reciprocal(cnt + EPS, approx=False)

    mean = _group_sum_lanes(x * w, P, A) * inv_denom
    xc = x - mean                                      # center ALL elems (matches torch)

    var = _group_sum_lanes(jnp.square(xc) * w, P, A) * inv_denom
    inv_std = pl.reciprocal(jnp.sqrt(var) + EPS, approx=False)

    g = g_ref[...].astype(jnp.float32)
    b = b_ref[...].astype(jnp.float32)
    y = g * (xc * inv_std) + b
    o_ref[...] = (y * w).astype(o_ref.dtype)


def axis_layer_norm(x, gamma, beta, *, block_rows=1024):
    """x: (B, S, P, A); gamma/beta: (1, 1, P, A) (or (P, A)). Normalizes dim=2."""
    B, S, P, A = x.shape
    N = B * S
    PA = P * A

    x2 = x.reshape(N, PA)                     # contiguous, free reshape
    g2 = jnp.asarray(gamma).reshape(1, PA)
    b2 = jnp.asarray(beta).reshape(1, PA)

    # Row-block size: big to amortize per-step overhead, multiple of 8 for the
    # sublane constraint.  VMEM use is tiny (~R*PA*4 B per buffer), safe for
    # v5e/v6e/v7x default scoped VMEM; with large N the grid has many blocks so
    # the "parallel" axis shards across v7x's two TensorCores.
    if N >= 8:
        R = max(8, (min(block_rows, N) // 8) * 8)
    else:
        R = N
    grid = (pl.cdiv(N, R),)

    kernel = functools.partial(_axis_ln_kernel, P, A)

    out = pl.pallas_call(
        kernel,
        out_shape=jax.ShapeDtypeStruct((N, PA), x.dtype),
        grid_spec=pltpu.PrefetchScalarGridSpec(
            num_scalar_prefetch=0,
            grid=grid,
            in_specs=[
                pl.BlockSpec((R, PA), lambda i: (i, 0)),   # x rows (streamed)
                pl.BlockSpec((1, PA), lambda i: (0, 0)),   # gamma (resident)
                pl.BlockSpec((1, PA), lambda i: (0, 0)),   # beta  (resident)
            ],
            out_specs=pl.BlockSpec((R, PA), lambda i: (i, 0)),
        ),
        compiler_params=pltpu.CompilerParams(
            dimension_semantics=("parallel",),
        ),
    )(x2, g2, b2)

    return out.reshape(B, S, P, A)


def _reference(x, gamma, beta):
    w = (x != 0).astype(x.dtype)
    denom = jnp.sum(w, axis=2, keepdims=True) + EPS
    xc = x - jnp.sum(x * w, axis=2, keepdims=True) / denom
    std = jnp.sqrt(jnp.sum(jnp.square(xc) * w, axis=2, keepdims=True) / denom)
    xn = xc / (std + EPS)
    return (gamma * xn + beta) * w


if __name__ == "__main__":
    # Shapes consistent with the module: x of shape (B, S, num_points, num_axes).
    B, S, P, A = 2, 8, 16, 8
    key = jax.random.PRNGKey(0)
    kx, kmask, kg, kb = jax.random.split(key, 4)

    x = jax.random.normal(kx, (B, S, P, A), dtype=jnp.float32)
    # Introduce zeros so the nonzero mask actually matters.
    drop = jax.random.bernoulli(kmask, p=0.3, shape=(B, S, P, A))
    x = jnp.where(drop, 0.0, x)

    # Deterministic xavier_uniform-style init for gamma/beta of shape (1,1,P,A):
    # fan_in = fan_out = P*A  ->  bound = sqrt(6 / (2*P*A)) = sqrt(3/(P*A))
    bound = math.sqrt(3.0 / (P * A))
    gamma = jax.random.uniform(kg, (1, 1, P, A), minval=-bound, maxval=bound,
                               dtype=jnp.float32)
    beta = jax.random.uniform(kb, (1, 1, P, A), minval=-bound, maxval=bound,
                              dtype=jnp.float32)

    # block_rows=8 so the tiny demo still exercises multiple grid steps with
    # resident gamma/beta; realistic sizes use the default 1024-row blocks.
    out = axis_layer_norm(x, gamma, beta, block_rows=8)
    out = jax.block_until_ready(out)

    ref = _reference(x, gamma, beta)
    assert out.shape == x.shape
    assert jnp.allclose(out, ref, atol=1e-5, rtol=1e-5), float(
        jnp.max(jnp.abs(out - ref)))

    print("KERNEL_OK")
</pallas_src>

<mosaic_0001>
module attributes {stable_mosaic.version = 11 : i64} {
  func.func @_axis_ln_kernel(%arg0: i32, %arg1: memref<8x128xf32, #tpu.memory_space<vmem>>, %arg2: memref<1x128xf32, #tpu.memory_space<vmem>>, %arg3: memref<1x128xf32, #tpu.memory_space<vmem>>, %arg4: memref<8x128xf32, #tpu.memory_space<vmem>>) attributes {dimension_semantics = [#tpu.dimension_semantics<parallel>], iteration_bounds = array<i64: 2>, scalar_prefetch = 0 : i64, scratch_operands = 0 : i64, tpu.core_type = #tpu.core_type<tc>, window_params = [{transform_indices = @transform_0, window_bounds = array<i64: 8, 128>}, {pipeline_mode = #tpu.pipeline_mode<synchronous>, transform_indices = @transform_1, window_bounds = array<i64: 1, 128>}, {pipeline_mode = #tpu.pipeline_mode<synchronous>, transform_indices = @transform_2, window_bounds = array<i64: 1, 128>}, {transform_indices = @transform_3, window_bounds = array<i64: 8, 128>}]} {
    %c0 = arith.constant 0 : index
    %c0_0 = arith.constant 0 : index
    %0 = vector.load %arg1[%c0, %c0_0] : memref<8x128xf32, #tpu.memory_space<vmem>>, vector<8x128xf32>
    %cst = arith.constant 0.000000e+00 : f32
    %1 = vector.broadcast %cst : f32 to vector<8x128xf32>
    %2 = arith.cmpf one, %0, %1 : vector<8x128xf32>
    %3 = arith.extui %2 : vector<8x128xi1> to vector<8x128xi32>
    %4 = arith.sitofp %3 : vector<8x128xi32> to vector<8x128xf32>
    %c8_i32 = arith.constant 8 : i32
    %5 = tpu.dynamic_rotate %4 by %c8_i32 dim 1 : vector<8x128xf32>, i32 -> vector<8x128xf32>
    %6 = arith.addf %4, %5 : vector<8x128xf32>
    %c16_i32 = arith.constant 16 : i32
    %7 = tpu.dynamic_rotate %6 by %c16_i32 dim 1 : vector<8x128xf32>, i32 -> vector<8x128xf32>
    %8 = arith.addf %6, %7 : vector<8x128xf32>
    %c32_i32 = arith.constant 32 : i32
    %9 = tpu.dynamic_rotate %8 by %c32_i32 dim 1 : vector<8x128xf32>, i32 -> vector<8x128xf32>
    %10 = arith.addf %8, %9 : vector<8x128xf32>
    %c64_i32 = arith.constant 64 : i32
    %11 = tpu.dynamic_rotate %10 by %c64_i32 dim 1 : vector<8x128xf32>, i32 -> vector<8x128xf32>
    %12 = arith.addf %10, %11 : vector<8x128xf32>
    %cst_1 = arith.constant 9.99999974E-6 : f32
    %13 = vector.broadcast %cst_1 : f32 to vector<8x128xf32>
    %14 = arith.addf %12, %13 : vector<8x128xf32>
    %15 = tpu.reciprocal %14 : vector<8x128xf32> -> vector<8x128xf32>
    %16 = arith.mulf %0, %4 : vector<8x128xf32>
    %c8_i32_2 = arith.constant 8 : i32
    %17 = tpu.dynamic_rotate %16 by %c8_i32_2 dim 1 : vector<8x128xf32>, i32 -> vector<8x128xf32>
    %18 = arith.addf %16, %17 : vector<8x128xf32>
    %c16_i32_3 = arith.constant 16 : i32
    %19 = tpu.dynamic_rotate %18 by %c16_i32_3 dim 1 : vector<8x128xf32>, i32 -> vector<8x128xf32>
    %20 = arith.addf %18, %19 : vector<8x128xf32>
    %c32_i32_4 = arith.constant 32 : i32
    %21 = tpu.dynamic_rotate %20 by %c32_i32_4 dim 1 : vector<8x128xf32>, i32 -> vector<8x128xf32>
    %22 = arith.addf %20, %21 : vector<8x128xf32>
    %c64_i32_5 = arith.constant 64 : i32
    %23 = tpu.dynamic_rotate %22 by %c64_i32_5 dim 1 : vector<8x128xf32>, i32 -> vector<8x128xf32>
    %24 = arith.addf %22, %23 : vector<8x128xf32>
    %25 = arith.mulf %24, %15 : vector<8x128xf32>
    %26 = arith.subf %0, %25 : vector<8x128xf32>
    %27 = arith.mulf %26, %26 : vector<8x128xf32>
    %28 = arith.mulf %27, %4 : vector<8x128xf32>
    %c8_i32_6 = arith.constant 8 : i32
    %29 = tpu.dynamic_rotate %28 by %c8_i32_6 dim 1 : vector<8x128xf32>, i32 -> vector<8x128xf32>
    %30 = arith.addf %28, %29 : vector<8x128xf32>
    %c16_i32_7 = arith.constant 16 : i32
    %31 = tpu.dynamic_rotate %30 by %c16_i32_7 dim 1 : vector<8x128xf32>, i32 -> vector<8x128xf32>
    %32 = arith.addf %30, %31 : vector<8x128xf32>
    %c32_i32_8 = arith.constant 32 : i32
    %33 = tpu.dynamic_rotate %32 by %c32_i32_8 dim 1 : vector<8x128xf32>, i32 -> vector<8x128xf32>
    %34 = arith.addf %32, %33 : vector<8x128xf32>
    %c64_i32_9 = arith.constant 64 : i32
    %35 = tpu.dynamic_rotate %34 by %c64_i32_9 dim 1 : vector<8x128xf32>, i32 -> vector<8x128xf32>
    %36 = arith.addf %34, %35 : vector<8x128xf32>
    %37 = arith.mulf %36, %15 : vector<8x128xf32>
    %38 = math.sqrt %37 : vector<8x128xf32>
    %cst_10 = arith.constant 9.99999974E-6 : f32
    %39 = vector.broadcast %cst_10 : f32 to vector<8x128xf32>
    %40 = arith.addf %38, %39 : vector<8x128xf32>
    %41 = tpu.reciprocal %40 : vector<8x128xf32> -> vector<8x128xf32>
    %c0_11 = arith.constant 0 : index
    %c0_12 = arith.constant 0 : index
    %42 = vector.load %arg2[%c0_11, %c0_12] : memref<1x128xf32, #tpu.memory_space<vmem>>, vector<1x128xf32>
    %c0_13 = arith.constant 0 : index
    %c0_14 = arith.constant 0 : index
    %43 = vector.load %arg3[%c0_13, %c0_14] : memref<1x128xf32, #tpu.memory_space<vmem>>, vector<1x128xf32>
    %44 = arith.mulf %26, %41 : vector<8x128xf32>
    %45 = vector.broadcast %42 : vector<1x128xf32> to vector<8x128xf32>
    %46 = arith.mulf %45, %44 : vector<8x128xf32>
    %47 = vector.broadcast %43 : vector<1x128xf32> to vector<8x128xf32>
    %48 = arith.addf %46, %47 : vector<8x128xf32>
    %49 = arith.mulf %48, %4 : vector<8x128xf32>
    %c0_15 = arith.constant 0 : index
    %c0_16 = arith.constant 0 : index
    %50 = vector.load %arg4[%c0_15, %c0_16] : memref<8x128xf32, #tpu.memory_space<vmem>>, vector<8x128xf32>
    tpu.vector_store %arg4[%c0_15, %c0_16], %49 {strides = array<i32>} : memref<8x128xf32, #tpu.memory_space<vmem>>, vector<8x128xf32>,
    return
  }
  func.func @transform_0(%arg0: i32) -> (i32, i32) {
    %c0_i32 = arith.constant 0 : i32
    %c0_i32_0 = arith.constant 0 : i32
    return %arg0, %c0_i32 : i32, i32
  }
  func.func @transform_1(%arg0: i32) -> (i32, i32) {
    %c0_i32 = arith.constant 0 : i32
    %c0_i32_0 = arith.constant 0 : i32
    %c0_i32_1 = arith.constant 0 : i32
    return %c0_i32, %c0_i32_0 : i32, i32
  }
  func.func @transform_2(%arg0: i32) -> (i32, i32) {
    %c0_i32 = arith.constant 0 : i32
    %c0_i32_0 = arith.constant 0 : i32
    %c0_i32_1 = arith.constant 0 : i32
    return %c0_i32, %c0_i32_0 : i32, i32
  }
  func.func @transform_3(%arg0: i32) -> (i32, i32) {
    %c0_i32 = arith.constant 0 : i32
    %c0_i32_0 = arith.constant 0 : i32
    return %arg0, %c0_i32 : i32, i32
  }
}

</mosaic_0001>

<llo_original>
// kernel: tpu_custom_call.1
$region0: #{tpu_custom_call.1}
  #allocation0 [shape = 'u32[]', space=smem, size = 0x4, offset = 0x4, fixed_abs, tag = 'smem constant byte address 0x4 - core index']
  #allocation1 [shape = 'u32[144,128]{1,0:T(1,128)}', space=vmem, size = 0x12000, scoped, tag = 'internal scratch']
  %s0 = inlined_call_operand.hbm [shape: f32[16,128], index: 0, kind: input, shape index: {}]
  %s1 = inlined_call_operand.vmem [shape: f32[1,128], index: 1, kind: input, shape index: {}]
  %s2 = inlined_call_operand.vmem [shape: f32[1,128], index: 2, kind: input, shape index: {}]
  %s3 = inlined_call_operand.hbm [shape: f32[16,128], index: 3, kind: output, shape index: {}]
  %s4 = sld [smem:[#allocation0]]
  $region49: #{tpu_custom_call.1} parent=0
    _
  %s6 = ssub.s32 1, %s4
  %s7 = scalar_select 0, %s6, %s4
  $region1: #{tpu_custom_call.1} parent=0
    #allocation2 [shape = 'u8[8192]{0}', space=vmem, size = 0x2000, scoped, tag = 'input window, operand 0']
    #allocation3 [shape = 's32[2]{0}', space=sflag, size = 0x8, scoped, tag = 'scoped memory for tpu_custom_call.1']
    #allocation4 [shape = 's32[2]{0}', space=sflag, size = 0x8, scoped, tag = 'scoped memory for tpu_custom_call.1']
    #allocation5 [shape = 'u8[8192]{0}', space=vmem, size = 0x2000, scoped, tag = 'output window, operand 0']
    %8 = vsyncpa [#allocation3], 0
    %s9 = scalar_lea.sflag [#allocation3], 1
    %10 = vsyncpa %s9, 0
    %11 = vsyncpa [#allocation4], 0
    %s12 = scalar_lea.sflag [#allocation4], 1
    %13 = vsyncpa %s12, 0
    loop: start=0, step=1, limit=4
    $region2: #{tpu_custom_call.1} parent=1 // loop_pre_header
      _
    $region3: #{tpu_custom_call.1} parent=1 // loop_header
      %s15 = sphi 0, %s19
      %p16 = scmp.ge.s32.totalorder %s15, 4
      %s25 = sphi 0, %s27
      %s28 = sphi 0, %s25
      %s29 = sphi 0, %s28
      %s45 = sphi 0, %s29
      %s49 = sphi 0, %s49
      %s51 = sphi 0, %s49
      %s52 = sphi 0, %s51
      %s66 = sphi 0, %s52
      %s70 = sphi 0, %s70
      %s72 = sphi 0, %s70
      %s73 = sphi 0, %s72
      %s87 = sphi 0, %s73
      %s93 = sphi 0, %s95
      %s96 = sphi 0, %s93
      %s97 = sphi 0, %s96
      %s113 = sphi 0, %s97
    $region4: #{tpu_custom_call.1} parent=1 // loop_header_branch
      %18 = sbr.rel (%p16) target = $region8
    $region5: #{tpu_custom_call.1} parent=1 // loop_body
      %s20 = ssub.s32 %s15, 1
      %s21 = ssub.s32 %s15, 2
      %s22 = sadd.s32 %s15, 1
      %s23 = ssub.s32 %s15, %s22
      %p24 = scmp.eq.s32.totalorder %s23, 0
      %s26 = sadd.s32 %s25, 1
      %s27 = scalar_select %p24, %s25, %s26
      %p30 = pneg %p24
      %p31 = scmp.eq.s32.totalorder %s15, 1
      %p32 = por %p30, %p31
      %p33 = scmp.ne.s32.totalorder %s25, %s28
      %p34 = scmp.eq.s32.totalorder %s15, 0
      %p35 = por %p33, %p34
      %p36 = scmp.ne.s32.totalorder %s25, %s28
      %p37 = scmp.eq.s32.totalorder %s20, 1
      %p38 = por %p36, %p37
      %p39 = scmp.ne.s32.totalorder %s28, %s29
      %p40 = scmp.eq.s32.totalorder %s20, 0
      %p41 = por %p39, %p40
      %p42 = scmp.ne.s32.totalorder %s28, %s29
      %p43 = scmp.eq.s32.totalorder %s21, 1
      %p44 = por %p42, %p43
      %p46 = scmp.ne.s32.totalorder %s29, %s45
      %p47 = scmp.eq.s32.totalorder %s21, 0
      %p48 = por %p46, %p47
      %s50 = sadd.s32 %s49, 1
      %p53 = scmp.eq.s32.totalorder %s15, 1
      %p54 = scmp.ne.s32.totalorder %s49, %s51
      %p55 = scmp.eq.s32.totalorder %s15, 0
      %p56 = por %p54, %p55
      %p57 = scmp.ne.s32.totalorder %s49, %s51
      %p58 = scmp.eq.s32.totalorder %s20, 1
      %p59 = por %p57, %p58
      %p60 = scmp.ne.s32.totalorder %s51, %s52
      %p61 = scmp.eq.s32.totalorder %s20, 0
      %p62 = por %p60, %p61
      %p63 = scmp.ne.s32.totalorder %s51, %s52
      %p64 = scmp.eq.s32.totalorder %s21, 1
      %p65 = por %p63, %p64
      %p67 = scmp.ne.s32.totalorder %s52, %s66
      %p68 = scmp.eq.s32.totalorder %s21, 0
      %p69 = por %p67, %p68
      %s71 = sadd.s32 %s70, 1
      %p74 = scmp.eq.s32.totalorder %s15, 1
      %p75 = scmp.ne.s32.totalorder %s70, %s72
      %p76 = scmp.eq.s32.totalorder %s15, 0
      %p77 = por %p75, %p76
      %p78 = scmp.ne.s32.totalorder %s70, %s72
      %p79 = scmp.eq.s32.totalorder %s20, 1
      %p80 = por %p78, %p79
      %p81 = scmp.ne.s32.totalorder %s72, %s73
      %p82 = scmp.eq.s32.totalorder %s20, 0
      %p83 = por %p81, %p82
      %p84 = scmp.ne.s32.totalorder %s72, %s73
      %p85 = scmp.eq.s32.totalorder %s21, 1
      %p86 = por %p84, %p85
      %p88 = scmp.ne.s32.totalorder %s73, %s87
      %p89 = scmp.eq.s32.totalorder %s21, 0
      %p90 = por %p88, %p89
      %s91 = ssub.s32 %s15, %s22
      %p92 = scmp.eq.s32.totalorder %s91, 0
      %s94 = sadd.s32 %s93, 1
      %s95 = scalar_select %p92, %s93, %s94
      %p98 = pneg %p92
      %p99 = scmp.eq.s32.totalorder %s15, 1
      %p100 = por %p98, %p99
      %p101 = scmp.ne.s32.totalorder %s93, %s96
      %p102 = scmp.eq.s32.totalorder %s15, 0
      %p103 = por %p101, %p102
      %p104 = scmp.ne.s32.totalorder %s93, %s96
      %p105 = scmp.eq.s32.totalorder %s20, 1
      %p106 = por %p104, %p105
      %p107 = scmp.ne.s32.totalorder %s96, %s97
      %p108 = scmp.eq.s32.totalorder %s20, 0
      %p109 = por %p107, %p108
      %p110 = scmp.ne.s32.totalorder %s96, %s97
      %p111 = scmp.eq.s32.totalorder %s21, 1
      %p112 = por %p110, %p111
      %p114 = scmp.ne.s32.totalorder %s97, %s113
      %p115 = scmp.eq.s32.totalorder %s21, 0
      %p116 = por %p114, %p115
      %p117 = scmp.le.s32.totalorder 1, %s15
      %p118 = scmp.lt.s32.totalorder %s15, 3
      %p119 = pnand %p117, %p118
      %p120 = pneg %p119
      // Predicated region
      $region9: #{tpu_custom_call.1} parent=5 // pred_check
        _
      $region10: #{tpu_custom_call.1} parent=5 // pred_check_branch
        %122 = sbr.rel (%p119) target = $region12
      $region11: #{tpu_custom_call.1} parent=5 // pred_region
        %s123 = ssub.s32 %s15, 1
        // Predicated region
        $region13: #{tpu_custom_call.1} parent=11 // pred_check
          %p124 = pneg %p62
        $region14: #{tpu_custom_call.1} parent=11 // pred_check_branch
          %126 = sbr.rel (%p124) target = $region16
        $region15: #{tpu_custom_call.1} parent=11 // pred_region
          _
        $region16: #{tpu_custom_call.1} parent=11 // pred_fallthru
          _
        // Predicated region
        $region17: #{tpu_custom_call.1} parent=11 // pred_check
          %p127 = pneg %p83
        $region18: #{tpu_custom_call.1} parent=11 // pred_check_branch
          %129 = sbr.rel (%p127) target = $region20
        $region19: #{tpu_custom_call.1} parent=11 // pred_region
          _
        $region20: #{tpu_custom_call.1} parent=11 // pred_fallthru
          _
      $region12: #{tpu_custom_call.1} parent=5 // pred_fallthru
        _
      %p130 = scmp.lt.s32.totalorder %s15, 2
      // Predicated region
      $region21: #{tpu_custom_call.1} parent=5 // pred_check
        %p131 = pneg %p130
      $region22: #{tpu_custom_call.1} parent=5 // pred_check_branch
        %133 = sbr.rel (%p131) target = $region24
      $region23: #{tpu_custom_call.1} parent=5 // pred_region
        // Predicated region
        $region25: #{tpu_custom_call.1} parent=23 // pred_check
          %p134 = pneg %p35
        $region26: #{tpu_custom_call.1} parent=23 // pred_check_branch
          %136 = sbr.rel (%p134) target = $region28
        $region27: #{tpu_custom_call.1} parent=23 // pred_region
          %s137 = sand.u32 %s25, 1
          %s138 = scalar_lea.sflag [#allocation3], %s137
          %s139 = sand.u32 %s25, 1
          %s140 = smul.addr %s139, 8
          %s141 = scalar_lea.vmem [#allocation2], %s140
          %s143 = ssub.s32 128, 128
          %144 = vsyncadd %s138, %s143
          %s145 = smul.addr %s15, 128
          %s146 = scalar_lea.hbm %s0, %s145
          %s148 = sshll.u32 %s141, 4
          %s149 = int_to_ptr.vmem [resolvable:$true] %s148
          %151 = dma.hbm_to_vmem [thread:$0]  %s146, 128, %s149, %s138
        $region28: #{tpu_custom_call.1} parent=23 // pred_fallthru
          _
      $region24: #{tpu_custom_call.1} parent=5 // pred_fallthru
        _
      %p152 = scmp.le.s32.totalorder 1, %s15
      %p153 = scmp.lt.s32.totalorder %s15, 3
      %p154 = pnand %p152, %p153
      %p155 = pneg %p154
      // Predicated region
      $region29: #{tpu_custom_call.1} parent=5 // pred_check
        _
      $region30: #{tpu_custom_call.1} parent=5 // pred_check_branch
        %157 = sbr.rel (%p154) target = $region32
      $region31: #{tpu_custom_call.1} parent=5 // pred_region
        %s158 = ssub.s32 %s15, 1
        %s159 = sand.u32 %s28, 1
        %s160 = scalar_lea.sflag [#allocation3], %s159
        %s161 = sand.u32 %s28, 1
        %s162 = smul.addr %s161, 8
        %s163 = scalar_lea.vmem [#allocation2], %s162
        // Predicated region
        $region33: #{tpu_custom_call.1} parent=31 // pred_check
          %p164 = pneg %p41
        $region34: #{tpu_custom_call.1} parent=31 // pred_check_branch
          %166 = sbr.rel (%p164) target = $region36
        $region35: #{tpu_custom_call.1} parent=31 // pred_region
          %167 = dma.done %s160, 128
        $region36: #{tpu_custom_call.1} parent=31 // pred_fallthru
          _
        %s168 = sand.u32 %s28, 1
        %s169 = scalar_lea.sflag [#allocation3], %s168
        %s170 = sand.u32 %s28, 1
        %s171 = smul.addr %s170, 8
        %s172 = scalar_lea.vmem [#allocation2], %s171
        %p173 = pneg %p41
        %p174 = pneg %p38
        %p175 = pneg %p62
        %p176 = pneg %p59
        %p177 = pneg %p83
        %p178 = pneg %p80
        %p179 = pneg %p109
        %p180 = pneg %p106
        %s181 = sand.u32 %s96, 1
        %s182 = scalar_lea.sflag [#allocation4], %s181
        %s183 = sand.u32 %s96, 1
        %s184 = smul.addr %s183, 8
        %s185 = scalar_lea.vmem [#allocation5], %s184
        %v186 = vld [vmem:[%s163] sm:$0xff]
        %vm187 = vcmp.ne.f32.partialorder %v186, 0.0
        %v188 = vsel %vm187, 1, 0
        %v189 = vcvt.s32.f32 %v188
        %190 = vrot.lane.b32.xlu0 %v189, 8
        %v191 = vpop.permute.xlu0 %190
        %v192 = vadd.f32 %v189, %v191
        %193 = vrot.lane.b32.xlu0 %v192, 16
        %v194 = vpop.permute.xlu0 %193
        %v195 = vadd.f32 %v192, %v194
        %196 = vrot.lane.b32.xlu0 %v195, 32
        %v197 = vpop.permute.xlu0 %196
        %v198 = vadd.f32 %v195, %v197
        %199 = vrot.lane.b32.xlu0 %v198, 64
        %v200 = vpop.permute.xlu0 %199
        %v201 = vadd.f32 %v198, %v200
        %v202 = vadd.f32 %v201, 1e-05
        %v203 = vrcp.pop %v202
        %v204 = vmul.f32 %v186, %v189
        %205 = vrot.lane.b32.xlu0 %v204, 8
        %v206 = vpop.permute.xlu0 %205
        %v207 = vadd.f32 %v204, %v206
        %208 = vrot.lane.b32.xlu0 %v207, 16
        %v209 = vpop.permute.xlu0 %208
        %v210 = vadd.f32 %v207, %v209
        %211 = vrot.lane.b32.xlu0 %v210, 32
        %v212 = vpop.permute.xlu0 %211
        %v213 = vadd.f32 %v210, %v212
        %214 = vrot.lane.b32.xlu0 %v213, 64
        %v215 = vpop.permute.xlu0 %214
        %v216 = vadd.f32 %v213, %v215
        %v217 = vmul.f32 %v216, %v203
        %v218 = vsub.f32 %v186, %v217
        %v219 = vmul.f32 %v218, %v218
        %v220 = vmul.f32 %v219, %v189
        %221 = vrot.lane.b32.xlu0 %v220, 8
        %v222 = vpop.permute.xlu0 %221
        %v223 = vadd.f32 %v220, %v222
        %224 = vrot.lane.b32.xlu0 %v223, 16
        %v225 = vpop.permute.xlu0 %224
        %v226 = vadd.f32 %v223, %v225
        %227 = vrot.lane.b32.xlu0 %v226, 32
        %v228 = vpop.permute.xlu0 %227
        %v229 = vadd.f32 %v226, %v228
        %230 = vrot.lane.b32.xlu0 %v229, 64
        %v231 = vpop.permute.xlu0 %230
        %v232 = vadd.f32 %v229, %v231
        %v233 = vmul.f32 %v232, %v203
        %v234 = vrsqrt.pop %v233
        %v235 = vmul.f32 %v233, %v234
        %vm236 = vcmp.eq.f32.partialorder %v233, inf
        %v237 = vsel %vm236, %v233, %v235
        %vm238 = vcmp.eq.f32.partialorder %v233, 0.0
        %v239 = vand.u32 %v233, 2147483648
        %v240 = vsel %vm238, %v239, %v237
        %v241 = vadd.f32 %v240, 1e-05
        %v242 = vrcp.pop %v241
        %v243 = vld [vmem:[%s1] sm:$0x1]
        %v244 = vld [vmem:[%s2] sm:$0x1]
        %v245 = vmul.f32 %v218, %v242
        %v247 = vlaneseq
        %v248 = vshrl.u32 %v247, 7
        %v249 = vsub.s32 0, %v248
        %v250 = vrot.slane %v243, %v249
        %v252 = vmul.f32 %v250, %v245
        %v254 = vlaneseq
        %v255 = vshrl.u32 %v254, 7
        %v256 = vsub.s32 0, %v255
        %v257 = vrot.slane %v244, %v256
        %v259 = vadd.f32 %v252, %v257
        %v260 = vmul.f32 %v259, %v189
        %261 = vst [vmem:[%s185] sm:$0xff] %v260
        %s262 = sand.u32 %s96, 1
        %s263 = scalar_lea.sflag [#allocation4], %s262
        %s264 = sand.u32 %s96, 1
        %s265 = smul.addr %s264, 8
        %s266 = scalar_lea.vmem [#allocation5], %s265
        // Predicated region
        $region37: #{tpu_custom_call.1} parent=31 // pred_check
          %p267 = pneg %p106
        $region38: #{tpu_custom_call.1} parent=31 // pred_check_branch
          %269 = sbr.rel (%p267) target = $region40
        $region39: #{tpu_custom_call.1} parent=31 // pred_region
          %s271 = ssub.s32 128, 128
          %272 = vsyncadd %s263, %s271
          %s273 = smul.addr %s20, 128
          %s274 = scalar_lea.hbm %s3, %s273
          %s276 = sshll.u32 %s266, 4
          %s277 = int_to_ptr.vmem [resolvable:$true] %s276
          %279 = dma.vmem_to_hbm [thread:$0]  %s277, 128, %s274, %s263
        $region40: #{tpu_custom_call.1} parent=31 // pred_fallthru
          _
      $region32: #{tpu_custom_call.1} parent=5 // pred_fallthru
        _
      %p280 = scmp.le.s32.totalorder 2, %s15
      // Predicated region
      $region41: #{tpu_custom_call.1} parent=5 // pred_check
        %p281 = pneg %p280
      $region42: #{tpu_custom_call.1} parent=5 // pred_check_branch
        %283 = sbr.rel (%p281) target = $region44
      $region43: #{tpu_custom_call.1} parent=5 // pred_region
        %s284 = ssub.s32 %s15, 2
        // Predicated region
        $region45: #{tpu_custom_call.1} parent=43 // pred_check
          %p285 = pneg %p112
        $region46: #{tpu_custom_call.1} parent=43 // pred_check_branch
          %287 = sbr.rel (%p285) target = $region48
        $region47: #{tpu_custom_call.1} parent=43 // pred_region
          %s288 = sand.u32 %s97, 1
          %s289 = scalar_lea.sflag [#allocation4], %s288
          %s290 = sand.u32 %s97, 1
          %s291 = smul.addr %s290, 8
          %s292 = scalar_lea.vmem [#allocation5], %s291
          %293 = dma.done %s289, 128
        $region48: #{tpu_custom_call.1} parent=43 // pred_fallthru
          _
      $region44: #{tpu_custom_call.1} parent=5 // pred_fallthru
        _
    $region6: #{tpu_custom_call.1} parent=1 // loop_footer
      %s19 = sadd.s32 1, %s15
    $region7: #{tpu_custom_call.1} parent=1 // loop_footer_branch
      %14 = sbr.rel target = $region3
    $region8: #{tpu_custom_call.1} parent=1 // loop_exit
      _
    %294 = vsyncpa [#allocation3], 1
    %s295 = scalar_lea.sflag [#allocation3], 1
    %296 = vsyncpa %s295, 1
    %297 = vsyncpa [#allocation4], 1
    %s298 = scalar_lea.sflag [#allocation4], 1
    %299 = vsyncpa %s298, 1

</llo_original>
